<compile_context>
chip_gen: v6e
topology: v6e:2x2x1
jax: 0.10.0
libtpu: 0.0.40
codegen_flags: <defaults>
</compile_context>

<pallas_src>
import jax
import jax.numpy as jnp
from jax.experimental import pallas as pl
from jax.experimental.pallas import tpu as pltpu


def object_encoder_kernel(seg_ref, feat_ref, w_ref, b_ref, out_ref,
                          sum_acc, cnt_acc):
    # seg_ref : [TB, TN]     float32 (0/1 mask)
    # feat_ref: [TB, TN, H]  native dtype (e.g. bf16)
    # w_ref   : [H, O]       native dtype (e.g. bf16)
    # b_ref   : [1, O]       float32
    # out_ref : [TB, O]      float32
    # sum_acc : [TB, H]      float32 scratch (masked-sum accumulator)
    # cnt_acc : [TB, 1]      float32 scratch (token-count accumulator)
    n = pl.program_id(1)

    @pl.when(n == 0)
    def _init():
        sum_acc[...] = jnp.zeros_like(sum_acc)
        cnt_acc[...] = jnp.zeros_like(cnt_acc)

    seg = seg_ref[...]                                   # [TB, TN] f32
    feat = feat_ref[...]                                 # [TB, TN, H]

    # Masked sum over the token axis as a batched MXU contraction with
    # float32 accumulation (no [TB, TN, H] masked intermediate).
    seg3 = seg.astype(feat.dtype)[:, None, :]            # [TB, 1, TN]
    partial = jnp.einsum("bon,bnh->boh", seg3, feat,
                         preferred_element_type=jnp.float32)  # [TB, 1, H]
    sum_acc[...] += partial[:, 0, :]
    cnt_acc[...] += jnp.sum(seg, axis=1, keepdims=True)  # [TB, 1]

    @pl.when(n == pl.num_programs(1) - 1)
    def _finalize():
        counts = jnp.maximum(cnt_acc[...], 1.0)          # masked_fill(==0, 1)
        inv = pl.reciprocal(counts, approx=True)         # EUP slot, ~free
        pooled = (sum_acc[...] * inv).astype(w_ref.dtype)   # [TB, H]
        out_ref[...] = (
            jnp.dot(pooled, w_ref[...], preferred_element_type=jnp.float32)
            + b_ref[...]
        ).astype(out_ref.dtype)


def object_encoder_forward(segmentations, image_features, w, b,
                           *, tb=8, tn=256,
                           vmem_limit_bytes=64 * 1024 * 1024):
    """segmentations: [B, N] (bool/float), image_features: [B, N, H] (native
    dtype, e.g. bf16), w: [H, O], b: [O]  ->  [B, O] float32."""
    B, N = segmentations.shape
    H = image_features.shape[-1]
    O = w.shape[-1]

    # Mask is tiny -> f32 is fine; features & weights stay in native dtype.
    seg = segmentations.astype(jnp.float32)
    b2 = b.reshape(1, O).astype(jnp.float32)

    # Tile sizes respecting the (8, 128) constraint (full-dim block is always
    # legal as a fallback).
    if B % tb != 0:
        tb = B
    if (N % tn != 0) or (tn % 128 != 0):
        tn = N

    grid = (B // tb, N // tn)

    return pl.pallas_call(
        object_encoder_kernel,
        out_shape=jax.ShapeDtypeStruct((B, O), jnp.float32),
        grid_spec=pltpu.PrefetchScalarGridSpec(
            num_scalar_prefetch=0,
            grid=grid,
            in_specs=[
                pl.BlockSpec((tb, tn), lambda i, n: (i, n)),        # seg
                pl.BlockSpec((tb, tn, H), lambda i, n: (i, n, 0)),  # feat
                pl.BlockSpec((H, O), lambda i, n: (0, 0)),          # W (resident)
                pl.BlockSpec((1, O), lambda i, n: (0, 0)),          # bias
            ],
            out_specs=pl.BlockSpec((tb, O), lambda i, n: (i, 0)),   # resident over n
            scratch_shapes=[
                pltpu.VMEM((tb, H), jnp.float32),   # masked-sum accumulator
                pltpu.VMEM((tb, 1), jnp.float32),   # count accumulator
            ],
        ),
        compiler_params=pltpu.CompilerParams(
            dimension_semantics=("parallel", "arbitrary"),
            vmem_limit_bytes=vmem_limit_bytes,
        ),
    )(seg, image_features, w, b2)


if __name__ == "__main__":
    # Small synthetic shapes consistent with the module's forward:
    #   B objects/batches, N vision tokens, H vision hidden dim, O LLM hidden dim.
    # Chosen so the grid is (2, 2): two batch tiles (parallel) x two token
    # tiles (reduction), exercising the accumulator path.
    B, N, H, O = 16, 256, 128, 256
    TB, TN = 8, 128

    key = jax.random.PRNGKey(0)
    k_seg, k_feat, k_w, k_b = jax.random.split(key, 4)

    # Boolean segmentation masks (ensure at least one True per row).
    seg_bool = jax.random.uniform(k_seg, (B, N)) > 0.5
    seg_bool = seg_bool.at[:, 0].set(True)

    # Features and projector weights in bf16 (native streaming dtype).
    image_features = jax.random.normal(k_feat, (B, N, H),
                                       dtype=jnp.float32).astype(jnp.bfloat16)
    bound = 1.0 / (H ** 0.5)
    w = jax.random.uniform(k_w, (H, O), minval=-bound, maxval=bound,
                           dtype=jnp.float32).astype(jnp.bfloat16)
    b = jax.random.uniform(k_b, (O,), minval=-bound, maxval=bound,
                           dtype=jnp.float32)

    out = object_encoder_forward(seg_bool, image_features, w, b, tb=TB, tn=TN)
    out = jax.block_until_ready(out)

    # Pure-JAX reference (masked mean pooling + linear) on the bf16-rounded
    # inputs, with f32 math mirroring the kernel's f32 accumulation.
    featf = image_features.astype(jnp.float32)
    segf = seg_bool.astype(jnp.float32)
    sum_emb = jnp.sum(featf * segf[:, :, None], axis=1)
    cnt = jnp.maximum(jnp.sum(segf, axis=1, keepdims=True), 1.0)
    pooled_ref = (sum_emb / cnt).astype(jnp.bfloat16).astype(jnp.float32)
    ref = pooled_ref @ w.astype(jnp.float32) + b

    assert out.shape == (B, O)
    assert jnp.allclose(out, ref, atol=1e-2, rtol=1e-2), "mismatch vs reference"

    print("KERNEL_OK")
</pallas_src>

<mosaic_0001>
module attributes {stable_mosaic.version = 11 : i64} {
  func.func @object_encoder_kernel(%arg0: i32, %arg1: i32, %arg2: memref<8x128xf32, #tpu.memory_space<vmem>>, %arg3: memref<8x128x128xbf16, #tpu.memory_space<vmem>>, %arg4: memref<128x256xbf16, #tpu.memory_space<vmem>>, %arg5: memref<1x256xf32, #tpu.memory_space<vmem>>, %arg6: memref<8x256xf32, #tpu.memory_space<vmem>>, %arg7: memref<8x128xf32, #tpu.memory_space<vmem>>, %arg8: memref<8x1xf32, #tpu.memory_space<vmem>>) attributes {dimension_semantics = [#tpu.dimension_semantics<parallel>, #tpu.dimension_semantics<arbitrary>], iteration_bounds = array<i64: 2, 2>, scalar_prefetch = 0 : i64, scratch_operands = 2 : i64, tpu.core_type = #tpu.core_type<tc>, window_params = [{transform_indices = @transform_0, window_bounds = array<i64: 8, 128>}, {transform_indices = @transform_1, window_bounds = array<i64: 8, 128, 128>}, {pipeline_mode = #tpu.pipeline_mode<synchronous>, transform_indices = @transform_2, window_bounds = array<i64: 128, 256>}, {pipeline_mode = #tpu.pipeline_mode<synchronous>, transform_indices = @transform_3, window_bounds = array<i64: 1, 256>}, {transform_indices = @transform_4, window_bounds = array<i64: 8, 256>}]} {
    %c0_i32 = arith.constant 0 : i32
    %0 = arith.cmpi eq, %arg1, %c0_i32 : i32
    %1 = arith.extui %0 : i1 to i32
    %c0_i32_0 = arith.constant 0 : i32
    %2 = arith.cmpi ne, %1, %c0_i32_0 : i32
    scf.if %2 {
      %cst_15 = arith.constant 0.000000e+00 : f32
      %20 = vector.broadcast %cst_15 : f32 to vector<8x128xf32>
      %c0_16 = arith.constant 0 : index
      %c0_17 = arith.constant 0 : index
      %21 = vector.load %arg7[%c0_16, %c0_17] : memref<8x128xf32, #tpu.memory_space<vmem>>, vector<8x128xf32>
      tpu.vector_store %arg7[%c0_16, %c0_17], %20 {strides = array<i32>} : memref<8x128xf32, #tpu.memory_space<vmem>>, vector<8x128xf32>,
      %cst_18 = arith.constant 0.000000e+00 : f32
      %22 = vector.broadcast %cst_18 : f32 to vector<8x1xf32>
      %c0_19 = arith.constant 0 : index
      %c0_20 = arith.constant 0 : index
      %23 = vector.load %arg8[%c0_19, %c0_20] : memref<8x1xf32, #tpu.memory_space<vmem>>, vector<8x1xf32>
      tpu.vector_store %arg8[%c0_19, %c0_20], %22 {strides = array<i32>} : memref<8x1xf32, #tpu.memory_space<vmem>>, vector<8x1xf32>,
    } else {
    }
    %c0 = arith.constant 0 : index
    %c0_1 = arith.constant 0 : index
    %3 = vector.load %arg2[%c0, %c0_1] : memref<8x128xf32, #tpu.memory_space<vmem>>, vector<8x128xf32>
    %c0_2 = arith.constant 0 : index
    %c0_3 = arith.constant 0 : index
    %c0_4 = arith.constant 0 : index
    %4 = vector.load %arg3[%c0_2, %c0_3, %c0_4] : memref<8x128x128xbf16, #tpu.memory_space<vmem>>, vector<8x128x128xbf16>
    %5 = arith.truncf %3 : vector<8x128xf32> to vector<8x128xbf16>
    %6 = vector.shape_cast %5 : vector<8x128xbf16> to vector<8x1x128xbf16>
    "tpu.trace_start"() <{level = 10 : i32, message = "bon,bnh->boh"}> : () -> ()
    %cst = arith.constant dense<0.000000e+00> : vector<8x1x128xf32>
    %7 = tpu.matmul %6, %4, %cst {dimension_numbers = #tpu.dot_dimension_numbers<[2], [1], [1], [2], [0, 0, 0, 1, 1, 2], [0], [0]>} : vector<8x1x128xbf16>, vector<8x128x128xbf16>, vector<8x1x128xf32> -> vector<8x1x128xf32>
    "tpu.trace_stop"() : () -> ()
    %c0_5 = arith.constant 0 : index
    %c0_6 = arith.constant 0 : index
    %8 = vector.load %arg7[%c0_5, %c0_6] : memref<8x128xf32, #tpu.memory_space<vmem>>, vector<8x128xf32>
    %9 = vector.shape_cast %7 : vector<8x1x128xf32> to vector<8x128xf32>
    %10 = arith.addf %8, %9 : vector<8x128xf32>
    %c0_7 = arith.constant 0 : index
    %c0_8 = arith.constant 0 : index
    %11 = vector.load %arg7[%c0_7, %c0_8] : memref<8x128xf32, #tpu.memory_space<vmem>>, vector<8x128xf32>
    tpu.vector_store %arg7[%c0_7, %c0_8], %10 {strides = array<i32>} : memref<8x128xf32, #tpu.memory_space<vmem>>, vector<8x128xf32>,
    %c0_9 = arith.constant 0 : index
    %c0_10 = arith.constant 0 : index
    %12 = vector.load %arg8[%c0_9, %c0_10] : memref<8x1xf32, #tpu.memory_space<vmem>>, vector<8x1xf32>
    %cst_11 = arith.constant dense<0.000000e+00> : vector<8xf32>
    %13 = vector.multi_reduction <add>, %3, %cst_11 [1] : vector<8x128xf32> to vector<8xf32>
    %14 = vector.shape_cast %13 : vector<8xf32> to vector<8x1xf32>
    %15 = arith.addf %12, %14 : vector<8x1xf32>
    %c0_12 = arith.constant 0 : index
    %c0_13 = arith.constant 0 : index
    %16 = vector.load %arg8[%c0_12, %c0_13] : memref<8x1xf32, #tpu.memory_space<vmem>>, vector<8x1xf32>
    tpu.vector_store %arg8[%c0_12, %c0_13], %15 {strides = array<i32>} : memref<8x1xf32, #tpu.memory_space<vmem>>, vector<8x1xf32>,
    %c1_i32 = arith.constant 1 : i32
    %17 = arith.cmpi eq, %arg1, %c1_i32 : i32
    %18 = arith.extui %17 : i1 to i32
    %c0_i32_14 = arith.constant 0 : i32
    %19 = arith.cmpi ne, %18, %c0_i32_14 : i32
    scf.if %19 {
      %c0_15 = arith.constant 0 : index
      %c0_16 = arith.constant 0 : index
      %20 = vector.load %arg8[%c0_15, %c0_16] : memref<8x1xf32, #tpu.memory_space<vmem>>, vector<8x1xf32>
      %cst_17 = arith.constant 1.000000e+00 : f32
      %21 = vector.broadcast %cst_17 : f32 to vector<8x1xf32>
      %22 = arith.maximumf %20, %21 : vector<8x1xf32>
      %23 = tpu.reciprocal %22 {approx = true} : vector<8x1xf32> -> vector<8x1xf32>
      %c0_18 = arith.constant 0 : index
      %c0_19 = arith.constant 0 : index
      %24 = vector.load %arg7[%c0_18, %c0_19] : memref<8x128xf32, #tpu.memory_space<vmem>>, vector<8x128xf32>
      %25 = vector.broadcast %23 : vector<8x1xf32> to vector<8x128xf32>
      %26 = arith.mulf %24, %25 : vector<8x128xf32>
      %27 = arith.truncf %26 : vector<8x128xf32> to vector<8x128xbf16>
      %c0_20 = arith.constant 0 : index
      %c0_21 = arith.constant 0 : index
      %28 = vector.load %arg4[%c0_20, %c0_21] : memref<128x256xbf16, #tpu.memory_space<vmem>>, vector<128x256xbf16>
      %cst_22 = arith.constant dense<0.000000e+00> : vector<8x256xf32>
      %29 = tpu.matmul %27, %28, %cst_22 {dimension_numbers = #tpu.dot_dimension_numbers<[1], [0], [0], [1], [0, 0, 1, 1], [], []>} : vector<8x128xbf16>, vector<128x256xbf16>, vector<8x256xf32> -> vector<8x256xf32>
      %c0_23 = arith.constant 0 : index
      %c0_24 = arith.constant 0 : index
      %30 = vector.load %arg5[%c0_23, %c0_24] : memref<1x256xf32, #tpu.memory_space<vmem>>, vector<1x256xf32>
      %31 = vector.broadcast %30 : vector<1x256xf32> to vector<8x256xf32>
      %32 = arith.addf %29, %31 : vector<8x256xf32>
      %c0_25 = arith.constant 0 : index
      %c0_26 = arith.constant 0 : index
      %33 = vector.load %arg6[%c0_25, %c0_26] : memref<8x256xf32, #tpu.memory_space<vmem>>, vector<8x256xf32>
      tpu.vector_store %arg6[%c0_25, %c0_26], %32 {strides = array<i32>} : memref<8x256xf32, #tpu.memory_space<vmem>>, vector<8x256xf32>,
    } else {
    }
    return
  }
  func.func @transform_0(%arg0: i32, %arg1: i32) -> (i32, i32) {
    %c0_i32 = arith.constant 0 : i32
    return %arg0, %arg1 : i32, i32
  }
  func.func @transform_1(%arg0: i32, %arg1: i32) -> (i32, i32, i32) {
    %c0_i32 = arith.constant 0 : i32
    %c0_i32_0 = arith.constant 0 : i32
    return %arg0, %arg1, %c0_i32 : i32, i32, i32
  }
  func.func @transform_2(%arg0: i32, %arg1: i32) -> (i32, i32) {
    %c0_i32 = arith.constant 0 : i32
    %c0_i32_0 = arith.constant 0 : i32
    %c0_i32_1 = arith.constant 0 : i32
    return %c0_i32, %c0_i32_0 : i32, i32
  }
  func.func @transform_3(%arg0: i32, %arg1: i32) -> (i32, i32) {
    %c0_i32 = arith.constant 0 : i32
    %c0_i32_0 = arith.constant 0 : i32
    %c0_i32_1 = arith.constant 0 : i32
    return %c0_i32, %c0_i32_0 : i32, i32
  }
  func.func @transform_4(%arg0: i32, %arg1: i32) -> (i32, i32) {
    %c0_i32 = arith.constant 0 : i32
    %c0_i32_0 = arith.constant 0 : i32
    return %arg0, %c0_i32 : i32, i32
  }
}

</mosaic_0001>

<llo_original>
// kernel: tpu_custom_call.1
$region0: #{tpu_custom_call.1}
  #allocation0 [shape = 'u32[]', space=smem, size = 0x4, offset = 0x4, fixed_abs, tag = 'smem constant byte address 0x4 - core index']
  #allocation1 [shape = 'u32[144,128]{1,0:T(1,128)}', space=vmem, size = 0x12000, scoped, tag = 'internal scratch']
  #allocation2 [shape = 'f32[8,128]{1,0:T(8,128)}', space=vmem, size = 0x1000, scoped, tag = 'scratch operand']
  #allocation3 [shape = 'f32[8,1]{1,0:T(8,128)}', space=vmem, size = 0x1000, scoped, tag = 'scratch operand']
  #allocation11 [shape = 's32[]', space=sflag, size = 0x4, offset = 0, fixed_abs, tag = 'sflag constant byte address 0x0 - dummy sync flag']
  %s0 = inlined_call_operand.hbm [shape: f32[16,256], index: 0, kind: input, shape index: {}]
  %s1 = inlined_call_operand.hbm [shape: bf16[16,256,128], index: 1, kind: input, shape index: {}]
  %s2 = inlined_call_operand.hbm [shape: bf16[128,256], index: 2, kind: input, shape index: {}]
  %s3 = inlined_call_operand.vmem [shape: f32[1,256], index: 3, kind: input, shape index: {}]
  %s4 = inlined_call_operand.hbm [shape: f32[16,256], index: 4, kind: output, shape index: {}]
  %s5 = sld [smem:[#allocation0]]
  $region69: #{tpu_custom_call.1} parent=0
    _
  %s7 = ssub.s32 1, %s5
  %s8 = scalar_select 0, %s7, %s5
  $region1: #{tpu_custom_call.1} parent=0
    #allocation4 [shape = 'u8[8192]{0}', space=vmem, size = 0x2000, scoped, tag = 'input window, operand 0']
    #allocation5 [shape = 's32[2]{0}', space=sflag, size = 0x8, scoped, tag = 'scoped memory for tpu_custom_call.1']
    #allocation6 [shape = 's32[2]{0}', space=sflag, size = 0x8, scoped, tag = 'scoped memory for tpu_custom_call.1']
    #allocation7 [shape = 'u8[524288]{0}', space=vmem, size = 0x80000, scoped, tag = 'input window, operand 1']
    #allocation8 [shape = 's32[2]{0}', space=sflag, size = 0x8, scoped, tag = 'scoped memory for tpu_custom_call.1']
    #allocation9 [shape = 'u8[65536]{0}', space=vmem, size = 0x10000, scoped, tag = 'input window, operand 2, single buffered']
    #allocation10 [shape = 'u8[16384]{0}', space=vmem, size = 0x4000, scoped, tag = 'output window, operand 0']
    %9 = vsyncpa [#allocation5], 0
    %s10 = scalar_lea.sflag [#allocation5], 1
    %11 = vsyncpa %s10, 0
    %12 = vsyncpa [#allocation8], 0
    %s13 = scalar_lea.sflag [#allocation8], 1
    %14 = vsyncpa %s13, 0
    %15 = vsyncpa [#allocation6], 0
    %s16 = scalar_lea.sflag [#allocation6], 1
    %17 = vsyncpa %s16, 0
    loop: start=0, step=1, limit=6
    $region2: #{tpu_custom_call.1} parent=1 // loop_pre_header
      _
    $region3: #{tpu_custom_call.1} parent=1 // loop_header
      %s19 = sphi 0, %s23
      %p20 = scmp.ge.s32.totalorder %s19, 6
      %s26 = sphi 0, %s38
      %s27 = sphi 0, %s34
      %s28 = sphi 0, %s26
      %s29 = sphi 0, %s27
      %s30 = sphi 0, %s28
      %s31 = sphi 0, %s29
      %s43 = sphi 0, %s45
      %s46 = sphi 0, %s43
      %s47 = sphi 0, %s46
      %s63 = sphi 0, %s47
      %s71 = sphi 0, %s73
      %s74 = sphi 0, %s71
      %s75 = sphi 0, %s74
      %s91 = sphi 0, %s75
      %s95 = sphi 0, %s95
      %s97 = sphi 0, %s95
      %s98 = sphi 0, %s97
      %s112 = sphi 0, %s98
      %s116 = sphi 0, %s116
      %s118 = sphi 0, %s116
      %s119 = sphi 0, %s118
      %s133 = sphi 0, %s119
      %s139 = sphi 0, %s141
      %s142 = sphi 0, %s139
      %s143 = sphi 0, %s142
      %s159 = sphi 0, %s143
    $region4: #{tpu_custom_call.1} parent=1 // loop_header_branch
      %22 = sbr.rel (%p20) target = $region8
    $region5: #{tpu_custom_call.1} parent=1 // loop_body
      %s24 = ssub.s32 %s19, 1
      %s25 = ssub.s32 %s19, 2
      %s32 = sadd.s32 1, %s27
      %p33 = scmp.ge.s32.totalorder %s32, 2
      %s34 = scalar_select %p33, 0, %s32
      %s35 = sadd.s32 1, %s26
      %s36 = scalar_select %p33, %s35, %s26
      %p37 = scmp.ge.s32.totalorder %s36, 2
      %s38 = scalar_select %p37, 0, %s36
      %s39 = ssub.s32 %s26, %s38
      %s40 = ssub.s32 %s27, %s34
      %s41 = sor.u32 %s39, %s40
      %p42 = scmp.eq.s32.totalorder %s41, 0
      %s44 = sadd.s32 %s43, 1
      %s45 = scalar_select %p42, %s43, %s44
      %p48 = pneg %p42
      %p49 = scmp.eq.s32.totalorder %s19, 3
      %p50 = por %p48, %p49
      %p51 = scmp.ne.s32.totalorder %s43, %s46
      %p52 = scmp.eq.s32.totalorder %s19, 0
      %p53 = por %p51, %p52
      %p54 = scmp.ne.s32.totalorder %s43, %s46
      %p55 = scmp.eq.s32.totalorder %s24, 3
      %p56 = por %p54, %p55
      %p57 = scmp.ne.s32.totalorder %s46, %s47
      %p58 = scmp.eq.s32.totalorder %s24, 0
      %p59 = por %p57, %p58
      %p60 = scmp.ne.s32.totalorder %s46, %s47
      %p61 = scmp.eq.s32.totalorder %s25, 3
      %p62 = por %p60, %p61
      %p64 = scmp.ne.s32.totalorder %s47, %s63
      %p65 = scmp.eq.s32.totalorder %s25, 0
      %p66 = por %p64, %p65
      %s67 = ssub.s32 %s26, %s38
      %s68 = ssub.s32 %s27, %s34
      %s69 = sor.u32 %s67, %s68
      %p70 = scmp.eq.s32.totalorder %s69, 0
      %s72 = sadd.s32 %s71, 1
      %s73 = scalar_select %p70, %s71, %s72
      %p76 = pneg %p70
      %p77 = scmp.eq.s32.totalorder %s19, 3
      %p78 = por %p76, %p77
      %p79 = scmp.ne.s32.totalorder %s71, %s74
      %p80 = scmp.eq.s32.totalorder %s19, 0
      %p81 = por %p79, %p80
      %p82 = scmp.ne.s32.totalorder %s71, %s74
      %p83 = scmp.eq.s32.totalorder %s24, 3
      %p84 = por %p82, %p83
      %p85 = scmp.ne.s32.totalorder %s74, %s75
      %p86 = scmp.eq.s32.totalorder %s24, 0
      %p87 = por %p85, %p86
      %p88 = scmp.ne.s32.totalorder %s74, %s75
      %p89 = scmp.eq.s32.totalorder %s25, 3
      %p90 = por %p88, %p89
      %p92 = scmp.ne.s32.totalorder %s75, %s91
      %p93 = scmp.eq.s32.totalorder %s25, 0
      %p94 = por %p92, %p93
      %s96 = sadd.s32 %s95, 1
      %p99 = scmp.eq.s32.totalorder %s19, 3
      %p100 = scmp.ne.s32.totalorder %s95, %s97
      %p101 = scmp.eq.s32.totalorder %s19, 0
      %p102 = por %p100, %p101
      %p103 = scmp.ne.s32.totalorder %s95, %s97
      %p104 = scmp.eq.s32.totalorder %s24, 3
      %p105 = por %p103, %p104
      %p106 = scmp.ne.s32.totalorder %s97, %s98
      %p107 = scmp.eq.s32.totalorder %s24, 0
      %p108 = por %p106, %p107
      %p109 = scmp.ne.s32.totalorder %s97, %s98
      %p110 = scmp.eq.s32.totalorder %s25, 3
      %p111 = por %p109, %p110
      %p113 = scmp.ne.s32.totalorder %s98, %s112
      %p114 = scmp.eq.s32.totalorder %s25, 0
      %p115 = por %p113, %p114
      %s117 = sadd.s32 %s116, 1
      %p120 = scmp.eq.s32.totalorder %s19, 3
      %p121 = scmp.ne.s32.totalorder %s116, %s118
      %p122 = scmp.eq.s32.totalorder %s19, 0
      %p123 = por %p121, %p122
      %p124 = scmp.ne.s32.totalorder %s116, %s118
      %p125 = scmp.eq.s32.totalorder %s24, 3
      %p126 = por %p124, %p125
      %p127 = scmp.ne.s32.totalorder %s118, %s119
      %p128 = scmp.eq.s32.totalorder %s24, 0
      %p129 = por %p127, %p128
      %p130 = scmp.ne.s32.totalorder %s118, %s119
      %p131 = scmp.eq.s32.totalorder %s25, 3
      %p132 = por %p130, %p131
      %p134 = scmp.ne.s32.totalorder %s119, %s133
      %p135 = scmp.eq.s32.totalorder %s25, 0
      %p136 = por %p134, %p135
      %s137 = ssub.s32 %s26, %s38
      %p138 = scmp.eq.s32.totalorder %s137, 0
      %s140 = sadd.s32 %s139, 1
      %s141 = scalar_select %p138, %s139, %s140
      %p144 = pneg %p138
      %p145 = scmp.eq.s32.totalorder %s19, 3
      %p146 = por %p144, %p145
      %p147 = scmp.ne.s32.totalorder %s139, %s142
      %p148 = scmp.eq.s32.totalorder %s19, 0
      %p149 = por %p147, %p148
      %p150 = scmp.ne.s32.totalorder %s139, %s142
      %p151 = scmp.eq.s32.totalorder %s24, 3
      %p152 = por %p150, %p151
      %p153 = scmp.ne.s32.totalorder %s142, %s143
      %p154 = scmp.eq.s32.totalorder %s24, 0
      %p155 = por %p153, %p154
      %p156 = scmp.ne.s32.totalorder %s142, %s143
      %p157 = scmp.eq.s32.totalorder %s25, 3
      %p158 = por %p156, %p157
      %p160 = scmp.ne.s32.totalorder %s143, %s159
      %p161 = scmp.eq.s32.totalorder %s25, 0
      %p162 = por %p160, %p161
      %p163 = scmp.le.s32.totalorder 1, %s19
      %p164 = scmp.lt.s32.totalorder %s19, 5
      %p165 = pnand %p163, %p164
      %p166 = pneg %p165
      // Predicated region
      $region9: #{tpu_custom_call.1} parent=5 // pred_check
        _
      $region10: #{tpu_custom_call.1} parent=5 // pred_check_branch
        %168 = sbr.rel (%p165) target = $region12
      $region11: #{tpu_custom_call.1} parent=5 // pred_region
        %s169 = ssub.s32 %s19, 1
        // Predicated region
        $region13: #{tpu_custom_call.1} parent=11 // pred_check
          %p170 = pneg %p108
        $region14: #{tpu_custom_call.1} parent=11 // pred_check_branch
          %172 = sbr.rel (%p170) target = $region16
        $region15: #{tpu_custom_call.1} parent=11 // pred_region
          %s174 = ssub.s32 2048, 2048
          %175 = vsyncadd [#allocation8], %s174
          %s176 = sshll.u32 [#allocation9], 4
          %s177 = int_to_ptr.vmem [resolvable:$true] %s176
          %182 = dma.hbm_to_vmem [thread:$0]  %s2, 2048, %s177, [#allocation8], 128, 128, 8
        $region16: #{tpu_custom_call.1} parent=11 // pred_fallthru
          _
        // Predicated region
        $region17: #{tpu_custom_call.1} parent=11 // pred_check
          %p183 = pneg %p129
        $region18: #{tpu_custom_call.1} parent=11 // pred_check_branch
          %185 = sbr.rel (%p183) target = $region20
        $region19: #{tpu_custom_call.1} parent=11 // pred_region
          _
        $region20: #{tpu_custom_call.1} parent=11 // pred_fallthru
          _
      $region12: #{tpu_custom_call.1} parent=5 // pred_fallthru
        _
      %p186 = scmp.lt.s32.totalorder %s19, 4
      // Predicated region
      $region21: #{tpu_custom_call.1} parent=5 // pred_check
        %p187 = pneg %p186
      $region22: #{tpu_custom_call.1} parent=5 // pred_check_branch
        %189 = sbr.rel (%p187) target = $region24
      $region23: #{tpu_custom_call.1} parent=5 // pred_region
        // Predicated region
        $region25: #{tpu_custom_call.1} parent=23 // pred_check
          %p190 = pneg %p53
        $region26: #{tpu_custom_call.1} parent=23 // pred_check_branch
          %192 = sbr.rel (%p190) target = $region28
        $region27: #{tpu_custom_call.1} parent=23 // pred_region
          %s193 = sand.u32 %s43, 1
          %s194 = scalar_lea.sflag [#allocation5], %s193
          %s195 = sand.u32 %s43, 1
          %s196 = smul.addr %s195, 8
          %s197 = scalar_lea.vmem [#allocation4], %s196
          %s199 = ssub.s32 128, 128
          %200 = vsyncadd %s194, %s199
          %s201 = smul.addr %s26, 2
          %s202 = sadd.s32 %s27, %s201
          %s203 = smul.addr %s202, 128
          %s204 = scalar_lea.hbm %s0, %s203
          %s206 = sshll.u32 %s197, 4
          %s207 = int_to_ptr.vmem [resolvable:$true] %s206
          %209 = dma.hbm_to_vmem [thread:$0]  %s204, 128, %s207, %s194
        $region28: #{tpu_custom_call.1} parent=23 // pred_fallthru
          _
        // Predicated region
        $region29: #{tpu_custom_call.1} parent=23 // pred_check
          %p210 = pneg %p81
        $region30: #{tpu_custom_call.1} parent=23 // pred_check_branch
          %212 = sbr.rel (%p210) target = $region32
        $region31: #{tpu_custom_call.1} parent=23 // pred_region
          #allocation12 [shape = 'u32[6]{0}', space=smem, size = 0x18, scoped, tag = 'DMA stride descriptor']
          %s213 = sand.u32 %s19, 1
          %s214 = scalar_lea.sflag [#allocation8], %s213
          %s215 = sand.u32 %s71, 1
          %s216 = smul.addr %s215, 512
          %s217 = scalar_lea.vmem [#allocation7], %s216
          %s218 = smul.u32 8, %s26
          %s219 = smul.u32 16, %s27
          %s221 = ssub.s32 8192, 8192
          %222 = vsyncadd %s214, %s221
          %s223 = smul.addr %s218, 32
          %s224 = sadd.s32 %s219, %s223
          %s225 = smul.addr %s224, 64
          %s226 = scalar_lea.hbm %s1, %s225
          %s228 = sshll.u32 1, 14
          %s229 = sxor.u32 4294967295, %s228
          %s231 = sld [smem:[#allocation0]]
          %s232 = sadd.s32 2, %s231
          %s234 = sshll.u32 7, 26
          %s235 = sxor.u32 4294967295, %s234
          %s236 = sand.u32 0, %s235
          %s237 = sshll.u32 %s232, 26
          %s238 = sor.u32 %s236, %s237
          %s239 = sshll.u32 %s217, 4
          %s240 = int_to_ptr.vmem [resolvable:$true] %s239
          %246 = sst [smem:[#allocation12]] 2048
          %s247 = scalar_lea.smem [#allocation12], 1
          %248 = sst [smem:[%s247]] 1024
          %s249 = scalar_lea.smem [#allocation12], 2
          %250 = sst [smem:[%s249]] 16
          %s251 = scalar_lea.smem [#allocation12], 3
          %252 = sst [smem:[%s251]] 64
          %s253 = scalar_lea.smem [#allocation12], 4
          %254 = sst [smem:[%s253]] 64
          %s255 = scalar_lea.smem [#allocation12], 5
          %256 = sst [smem:[%s255]] 4
          %258 = dma.general %s226, 8192, %s240, %s214, 131072, [#allocation12], %s238, 0
        $region32: #{tpu_custom_call.1} parent=23 // pred_fallthru
          _
      $region24: #{tpu_custom_call.1} parent=5 // pred_fallthru
        _
      %p259 = scmp.le.s32.totalorder 1, %s19
      %p260 = scmp.lt.s32.totalorder %s19, 5
      %p261 = pnand %p259, %p260
      %p262 = pneg %p261
      // Predicated region
      $region33: #{tpu_custom_call.1} parent=5 // pred_check
        _
      $region34: #{tpu_custom_call.1} parent=5 // pred_check_branch
        %264 = sbr.rel (%p261) target = $region36
      $region35: #{tpu_custom_call.1} parent=5 // pred_region
        %s265 = ssub.s32 %s19, 1
        %s266 = sand.u32 %s46, 1
        %s267 = scalar_lea.sflag [#allocation5], %s266
        %s268 = sand.u32 %s46, 1
        %s269 = smul.addr %s268, 8
        %s270 = scalar_lea.vmem [#allocation4], %s269
        // Predicated region
        $region37: #{tpu_custom_call.1} parent=35 // pred_check
          %p271 = pneg %p59
        $region38: #{tpu_custom_call.1} parent=35 // pred_check_branch
          %273 = sbr.rel (%p271) target = $region40
        $region39: #{tpu_custom_call.1} parent=35 // pred_region
          %274 = dma.done %s267, 128
        $region40: #{tpu_custom_call.1} parent=35 // pred_fallthru
          _
        %s275 = sand.u32 %s24, 1
        %s276 = scalar_lea.sflag [#allocation8], %s275
        %s277 = sand.u32 %s74, 1
        %s278 = smul.addr %s277, 512
        %s279 = scalar_lea.vmem [#allocation7], %s278
        // Predicated region
        $region41: #{tpu_custom_call.1} parent=35 // pred_check
          %p280 = pneg %p87
        $region42: #{tpu_custom_call.1} parent=35 // pred_check_branch
          %282 = sbr.rel (%p280) target = $region44
        $region43: #{tpu_custom_call.1} parent=35 // pred_region
          %283 = dma.done %s276, 8192
        $region44: #{tpu_custom_call.1} parent=35 // pred_fallthru
          _
        // Predicated region
        $region45: #{tpu_custom_call.1} parent=35 // pred_check
          %p284 = pneg %p108
        $region46: #{tpu_custom_call.1} parent=35 // pred_check_branch
          %286 = sbr.rel (%p284) target = $region48
        $region47: #{tpu_custom_call.1} parent=35 // pred_region
          %287 = dma.done [#allocation8], 2048
        $region48: #{tpu_custom_call.1} parent=35 // pred_fallthru
          _
        %s288 = sand.u32 %s46, 1
        %s289 = scalar_lea.sflag [#allocation5], %s288
        %s290 = sand.u32 %s46, 1
        %s291 = smul.addr %s290, 8
        %s292 = scalar_lea.vmem [#allocation4], %s291
        %p293 = pneg %p59
        %p294 = pneg %p56
        %s295 = sand.u32 %s24, 1
        %s296 = scalar_lea.sflag [#allocation8], %s295
        %s297 = sand.u32 %s74, 1
        %s298 = smul.addr %s297, 512
        %s299 = scalar_lea.vmem [#allocation7], %s298
        %p300 = pneg %p87
        %p301 = pneg %p84
        %p302 = pneg %p108
        %p303 = pneg %p105
        %p304 = pneg %p129
        %p305 = pneg %p126
        %p306 = pneg %p155
        %p307 = pneg %p152
        %s308 = sand.u32 %s142, 1
        %s309 = scalar_lea.sflag [#allocation6], %s308
        %s310 = sand.u32 %s142, 1
        %s311 = smul.addr %s310, 16
        %s312 = scalar_lea.vmem [#allocation10], %s311
        %s313 = smul.u32 8, %s28
        %s314 = smul.u32 16, %s29
        %p316 = scmp.eq.s32.totalorder %s29, 0
        // Predicated region
        $region49: #{tpu_custom_call.1} parent=35 // pred_check
          %p317 = pneg %p316
        $region50: #{tpu_custom_call.1} parent=35 // pred_check_branch
          %319 = sbr.rel (%p317) target = $region52
        $region51: #{tpu_custom_call.1} parent=35 // pred_region
          %320 = vst [vmem:[#allocation2] sm:$0xff] 0.0
          %vm321 = vcmask 7168
          %322 = vst.msk [vmem:[#allocation3] sm:$0xff] %vm321, 0.0
        $region52: #{tpu_custom_call.1} parent=35 // pred_fallthru
          _
        %v323 = vld [vmem:[%s270] sm:$0xff]
        %v324 = vld [vmem:[%s279] sm:$0xf]
        %v325 = vld [vmem:[%s279 + $0x4] sm:$0xf]
        %v326 = vld [vmem:[%s279 + $0x8] sm:$0xf]
        %v327 = vld [vmem:[%s279 + $0xc] sm:$0xf]
        %v328 = vld [vmem:[%s279 + $0x10] sm:$0xf]
        %v329 = vld [vmem:[%s279 + $0x14] sm:$0xf]
        %v330 = vld [vmem:[%s279 + $0x18] sm:$0xf]
        %v331 = vld [vmem:[%s279 + $0x1c] sm:$0xf]
        %v332 = vld [vmem:[%s279 + $0x20] sm:$0xf]
        %v333 = vld [vmem:[%s279 + $0x24] sm:$0xf]
        %v334 = vld [vmem:[%s279 + $0x28] sm:$0xf]
        %v335 = vld [vmem:[%s279 + $0x2c] sm:$0xf]
        %v336 = vld [vmem:[%s279 + $0x30] sm:$0xf]
        %v337 = vld [vmem:[%s279 + $0x34] sm:$0xf]
        %v338 = vld [vmem:[%s279 + $0x38] sm:$0xf]
        %v339 = vld [vmem:[%s279 + $0x3c] sm:$0xf]
        %v340 = vld [vmem:[%s279 + $0x40] sm:$0xf]
        %v341 = vld [vmem:[%s279 + $0x44] sm:$0xf]
        %v342 = vld [vmem:[%s279 + $0x48] sm:$0xf]
        %v343 = vld [vmem:[%s279 + $0x4c] sm:$0xf]
        %v344 = vld [vmem:[%s279 + $0x50] sm:$0xf]
        %v345 = vld [vmem:[%s279 + $0x54] sm:$0xf]
        %v346 = vld [vmem:[%s279 + $0x58] sm:$0xf]
        %v347 = vld [vmem:[%s279 + $0x5c] sm:$0xf]
        %v348 = vld [vmem:[%s279 + $0x60] sm:$0xf]
        %v349 = vld [vmem:[%s279 + $0x64] sm:$0xf]
        %v350 = vld [vmem:[%s279 + $0x68] sm:$0xf]
        %v351 = vld [vmem:[%s279 + $0x6c] sm:$0xf]
        %v352 = vld [vmem:[%s279 + $0x70] sm:$0xf]
        %v353 = vld [vmem:[%s279 + $0x74] sm:$0xf]
        %v354 = vld [vmem:[%s279 + $0x78] sm:$0xf]
        %v355 = vld [vmem:[%s279 + $0x7c] sm:$0xf]
        %v356 = vld [vmem:[%s279 + $0x80] sm:$0xf]
        %v357 = vld [vmem:[%s279 + $0x84] sm:$0xf]
        %v358 = vld [vmem:[%s279 + $0x88] sm:$0xf]
        %v359 = vld [vmem:[%s279 + $0x8c] sm:$0xf]
        %v360 = vld [vmem:[%s279 + $0x90] sm:$0xf]
        %v361 = vld [vmem:[%s279 + $0x94] sm:$0xf]
        %v362 = vld [vmem:[%s279 + $0x98] sm:$0xf]
        %v363 = vld [vmem:[%s279 + $0x9c] sm:$0xf]
        %v364 = vld [vmem:[%s279 + $0xa0] sm:$0xf]
        %v365 = vld [vmem:[%s279 + $0xa4] sm:$0xf]
        %v366 = vld [vmem:[%s279 + $0xa8] sm:$0xf]
        %v367 = vld [vmem:[%s279 + $0xac] sm:$0xf]
        %v368 = vld [vmem:[%s279 + $0xb0] sm:$0xf]
        %v369 = vld [vmem:[%s279 + $0xb4] sm:$0xf]
        %v370 = vld [vmem:[%s279 + $0xb8] sm:$0xf]
        %v371 = vld [vmem:[%s279 + $0xbc] sm:$0xf]
        %v372 = vld [vmem:[%s279 + $0xc0] sm:$0xf]
        %v373 = vld [vmem:[%s279 + $0xc4] sm:$0xf]
        %v374 = vld [vmem:[%s279 + $0xc8] sm:$0xf]
        %v375 = vld [vmem:[%s279 + $0xcc] sm:$0xf]
        %v376 = vld [vmem:[%s279 + $0xd0] sm:$0xf]
        %v377 = vld [vmem:[%s279 + $0xd4] sm:$0xf]
        %v378 = vld [vmem:[%s279 + $0xd8] sm:$0xf]
        %v379 = vld [vmem:[%s279 + $0xdc] sm:$0xf]
        %v380 = vld [vmem:[%s279 + $0xe0] sm:$0xf]
        %v381 = vld [vmem:[%s279 + $0xe4] sm:$0xf]
        %v382 = vld [vmem:[%s279 + $0xe8] sm:$0xf]
        %v383 = vld [vmem:[%s279 + $0xec] sm:$0xf]
        %v384 = vld [vmem:[%s279 + $0xf0] sm:$0xf]
        %v385 = vld [vmem:[%s279 + $0xf4] sm:$0xf]
        %v386 = vld [vmem:[%s279 + $0xf8] sm:$0xf]
        %v387 = vld [vmem:[%s279 + $0xfc] sm:$0xf]
        %v388 = vld [vmem:[%s279 + $0x100] sm:$0xf]
        %v389 = vld [vmem:[%s279 + $0x104] sm:$0xf]
        %v390 = vld [vmem:[%s279 + $0x108] sm:$0xf]
        %v391 = vld [vmem:[%s279 + $0x10c] sm:$0xf]
        %v392 = vld [vmem:[%s279 + $0x110] sm:$0xf]
        %v393 = vld [vmem:[%s279 + $0x114] sm:$0xf]
        %v394 = vld [vmem:[%s279 + $0x118] sm:$0xf]
        %v395 = vld [vmem:[%s279 + $0x11c] sm:$0xf]
        %v396 = vld [vmem:[%s279 + $0x120] sm:$0xf]
        %v397 = vld [vmem:[%s279 + $0x124] sm:$0xf]
        %v398 = vld [vmem:[%s279 + $0x128] sm:$0xf]
        %v399 = vld [vmem:[%s279 + $0x12c] sm:$0xf]
        %v400 = vld [vmem:[%s279 + $0x130] sm:$0xf]
        %v401 = vld [vmem:[%s279 + $0x134] sm:$0xf]
        %v402 = vld [vmem:[%s279 + $0x138] sm:$0xf]
        %v403 = vld [vmem:[%s279 + $0x13c] sm:$0xf]
        %v404 = vld [vmem:[%s279 + $0x140] sm:$0xf]
        %v405 = vld [vmem:[%s279 + $0x144] sm:$0xf]
        %v406 = vld [vmem:[%s279 + $0x148] sm:$0xf]
        %v407 = vld [vmem:[%s279 + $0x14c] sm:$0xf]
        %v408 = vld [vmem:[%s279 + $0x150] sm:$0xf]
        %v409 = vld [vmem:[%s279 + $0x154] sm:$0xf]
        %v410 = vld [vmem:[%s279 + $0x158] sm:$0xf]
        %v411 = vld [vmem:[%s279 + $0x15c] sm:$0xf]
        %v412 = vld [vmem:[%s279 + $0x160] sm:$0xf]
        %v413 = vld [vmem:[%s279 + $0x164] sm:$0xf]
        %v414 = vld [vmem:[%s279 + $0x168] sm:$0xf]
        %v415 = vld [vmem:[%s279 + $0x16c] sm:$0xf]
        %v416 = vld [vmem:[%s279 + $0x170] sm:$0xf]
        %v417 = vld [vmem:[%s279 + $0x174] sm:$0xf]
        %v418 = vld [vmem:[%s279 + $0x178] sm:$0xf]
        %v419 = vld [vmem:[%s279 + $0x17c] sm:$0xf]
        %v420 = vld [vmem:[%s279 + $0x180] sm:$0xf]
        %v421 = vld [vmem:[%s279 + $0x184] sm:$0xf]
        %v422 = vld [vmem:[%s279 + $0x188] sm:$0xf]
        %v423 = vld [vmem:[%s279 + $0x18c] sm:$0xf]
        %v424 = vld [vmem:[%s279 + $0x190] sm:$0xf]
        %v425 = vld [vmem:[%s279 + $0x194] sm:$0xf]
        %v426 = vld [vmem:[%s279 + $0x198] sm:$0xf]
        %v427 = vld [vmem:[%s279 + $0x19c] sm:$0xf]
        %v428 = vld [vmem:[%s279 + $0x1a0] sm:$0xf]
        %v429 = vld [vmem:[%s279 + $0x1a4] sm:$0xf]
        %v430 = vld [vmem:[%s279 + $0x1a8] sm:$0xf]
        %v431 = vld [vmem:[%s279 + $0x1ac] sm:$0xf]
        %v432 = vld [vmem:[%s279 + $0x1b0] sm:$0xf]
        %v433 = vld [vmem:[%s279 + $0x1b4] sm:$0xf]
        %v434 = vld [vmem:[%s279 + $0x1b8] sm:$0xf]
        %v435 = vld [vmem:[%s279 + $0x1bc] sm:$0xf]
        %v436 = vld [vmem:[%s279 + $0x1c0] sm:$0xf]
        %v437 = vld [vmem:[%s279 + $0x1c4] sm:$0xf]
        %v438 = vld [vmem:[%s279 + $0x1c8] sm:$0xf]
        %v439 = vld [vmem:[%s279 + $0x1cc] sm:$0xf]
        %v440 = vld [vmem:[%s279 + $0x1d0] sm:$0xf]
        %v441 = vld [vmem:[%s279 + $0x1d4] sm:$0xf]
        %v442 = vld [vmem:[%s279 + $0x1d8] sm:$0xf]
        %v443 = vld [vmem:[%s279 + $0x1dc] sm:$0xf]
        %v444 = vld [vmem:[%s279 + $0x1e0] sm:$0xf]
        %v445 = vld [vmem:[%s279 + $0x1e4] sm:$0xf]
        %v446 = vld [vmem:[%s279 + $0x1e8] sm:$0xf]
        %v447 = vld [vmem:[%s279 + $0x1ec] sm:$0xf]
        %v448 = vld [vmem:[%s279 + $0x1f0] sm:$0xf]
        %v449 = vld [vmem:[%s279 + $0x1f4] sm:$0xf]
        %v450 = vld [vmem:[%s279 + $0x1f8] sm:$0xf]
        %v451 = vld [vmem:[%s279 + $0x1fc] sm:$0xf]
        %v452 = vpack.c.bf16 %v323, %v323
        %v455 = vunpack.c.l.s4 1966171168
        %v456 = vunpack.c.0.s8 %v455
        %v457 = vlaneseq
        %v458 = vshrl.u32 %v457, 7
        %v459 = vsub.s32 %v456, %v458
        %v460 = vrot.slane %v452, %v459
        %v461 = vcombine.high %v460, %v460
        %v463 = vunpack.c.l.s4 1966171168
        %v464 = vunpack.c.0.s8 %v463
        %v465 = vlaneseq
        %v466 = vshrl.u32 %v465, 7
        %v467 = vsub.s32 %v464, %v466
        %v468 = vrot.slane %v460, %v467
        %v470 = vunpack.c.l.s4 1966171168
        %v471 = vunpack.c.0.s8 %v470
        %v472 = vlaneseq
        %v473 = vshrl.u32 %v472, 7
        %v474 = vsub.s32 %v471, %v473
        %v475 = vrot.slane %v461, %v474
        %v476 = vcombine.high %v468, %v468
        %v477 = vcombine.high %v475, %v475
        %v478 = vunpack.i.l.s16 %v468
        %v479 = vunpack.i.h.s16 %v468
        %v480 = vunpack.i.l.s16 %v475
        %v481 = vunpack.i.h.s16 %v475
        %v482 = vunpack.i.l.s16 %v476
        %v483 = vunpack.i.h.s16 %v476
        %v484 = vunpack.i.l.s16 %v477
        %v485 = vunpack.i.h.s16 %v477
        %v486 = vpack.i.b16 %v478, %v478
        %v487 = vlaneseq
        %v488 = vshrl.u32 %v487, 7
        %v489 = vsub.s32 0, %v488
        %v490 = vrot.slane %v486, %v489
        %v508 = vunpack.c.l.b16 %v324
        %v509 = vunpack.c.l.b16 %v325
        %v510 = vunpack.c.l.b16 %v326
        %v511 = vunpack.c.l.b16 %v327
        %v512 = vunpack.c.l.b16 %v328
        %v513 = vunpack.c.l.b16 %v329
        %v514 = vunpack.c.l.b16 %v330
        %v515 = vunpack.c.l.b16 %v331
        %v516 = vunpack.c.l.b16 %v332
        %v517 = vunpack.c.l.b16 %v333
        %v518 = vunpack.c.l.b16 %v334
        %v519 = vunpack.c.l.b16 %v335
        %v520 = vunpack.c.l.b16 %v336
        %v521 = vunpack.c.l.b16 %v337
        %v522 = vunpack.c.l.b16 %v338
        %v523 = vunpack.c.l.b16 %v339
        %v524 = vpack.c.b16 %v509, %v508
        %v525 = vpack.c.b16 %v511, %v510
        %v526 = vpack.c.b16 %v513, %v512
        %v527 = vpack.c.b16 %v515, %v514
        %v528 = vpack.c.b16 %v517, %v516
        %v529 = vpack.c.b16 %v519, %v518
        %v530 = vpack.c.b16 %v521, %v520
        %v531 = vpack.c.b16 %v523, %v522
        %540 = vmatprep.subr.bf16.mxu0 0
        %541 = vmatpush1.bf16.msra.mxu0 %v531
        %542 = vmatprep.subr.bf16.mxu0 0
        %543 = vmatpush1.bf16.msra.mxu0 %v530
        %544 = vmatprep.subr.bf16.mxu0 0
        %545 = vmatpush1.bf16.msra.mxu0 %v529
        %546 = vmatprep.subr.bf16.mxu0 0
        %547 = vmatpush1.bf16.msra.mxu0 %v528
        %548 = vmatprep.subr.bf16.mxu0 0
        %549 = vmatpush1.bf16.msra.mxu0 %v527
        %550 = vmatprep.subr.bf16.mxu0 0
        %551 = vmatpush1.bf16.msra.mxu0 %v526
        %552 = vmatprep.subr.bf16.mxu0 0
        %553 = vmatpush1.bf16.msra.mxu0 %v525
        %554 = vmatprep.subr.bf16.mxu0 0
        %555 = vmatpush1.bf16.msra.mxu0 %v524
        %556 = vmatprep.subr.bf16.mxu0 0
        %557 = vmatpush2.bf16.msra.mxu0 0
        %558 = vmatprep.subr.bf16.mxu0 0
        %559 = vmatpush2.bf16.msra.mxu0 0
        %560 = vmatprep.subr.bf16.mxu0 0
        %561 = vmatpush2.bf16.msra.mxu0 0
        %562 = vmatprep.subr.bf16.mxu0 0
        %563 = vmatpush2.bf16.msra.mxu0 0
        %564 = vmatprep.subr.bf16.mxu0 0
        %565 = vmatpush2.bf16.msra.mxu0 0
        %566 = vmatprep.subr.bf16.mxu0 0
        %567 = vmatpush2.bf16.msra.mxu0 0
        %568 = vmatprep.subr.bf16.mxu0 0
        %569 = vmatpush2.bf16.msra.mxu0 0
        %570 = vmatprep.subr.bf16.mxu0 0
        %571 = vmatpush2.bf16.msra.mxu0 0
        %572 = vmatprep.mubr.bf16.mxu0 0
        %573 = vmatmul.mubr.bf16.gmra.mxu0 %v490
        %v574 = vpop.f32.mrf.mxu0
        %v575 = vadd.f32 0.0, %v574
        %v576 = vpop.f32.mrf.mxu0
        %v577 = vpop.f32.mrf.mxu0
        %v578 = vpop.f32.mrf.mxu0
        %579 = vdwg.mxu0
        %v580 = vpack.i.b16 %v479, %v479
        %v581 = vlaneseq
        %v582 = vshrl.u32 %v581, 7
        %v583 = vsub.s32 0, %v582
        %v584 = vrot.slane %v580, %v583
        %v602 = vunpack.c.l.b16 %v340
        %v603 = vunpack.c.l.b16 %v341
        %v604 = vunpack.c.l.b16 %v342
        %v605 = vunpack.c.l.b16 %v343
        %v606 = vunpack.c.l.b16 %v344
        %v607 = vunpack.c.l.b16 %v345
        %v608 = vunpack.c.l.b16 %v346
        %v609 = vunpack.c.l.b16 %v347
        %v610 = vunpack.c.l.b16 %v348
        %v611 = vunpack.c.l.b16 %v349
        %v612 = vunpack.c.l.b16 %v350
        %v613 = vunpack.c.l.b16 %v351
        %v614 = vunpack.c.l.b16 %v352
        %v615 = vunpack.c.l.b16 %v353
        %v616 = vunpack.c.l.b16 %v354
        %v617 = vunpack.c.l.b16 %v355
        %v618 = vpack.c.b16 %v603, %v602
        %v619 = vpack.c.b16 %v605, %v604
        %v620 = vpack.c.b16 %v607, %v606
        %v621 = vpack.c.b16 %v609, %v608
        %v622 = vpack.c.b16 %v611, %v610
        %v623 = vpack.c.b16 %v613, %v612
        %v624 = vpack.c.b16 %v615, %v614
        %v625 = vpack.c.b16 %v617, %v616
        %634 = vmatprep.subr.bf16.mxu0 0
        %635 = vmatpush1.bf16.msra.mxu0 %v625
        %636 = vmatprep.subr.bf16.mxu0 0
        %637 = vmatpush1.bf16.msra.mxu0 %v624
        %638 = vmatprep.subr.bf16.mxu0 0
        %639 = vmatpush1.bf16.msra.mxu0 %v623
        %640 = vmatprep.subr.bf16.mxu0 0
        %641 = vmatpush1.bf16.msra.mxu0 %v622
        %642 = vmatprep.subr.bf16.mxu0 0
        %643 = vmatpush1.bf16.msra.mxu0 %v621
        %644 = vmatprep.subr.bf16.mxu0 0
        %645 = vmatpush1.bf16.msra.mxu0 %v620
        %646 = vmatprep.subr.bf16.mxu0 0
        %647 = vmatpush1.bf16.msra.mxu0 %v619
        %648 = vmatprep.subr.bf16.mxu0 0
        %649 = vmatpush1.bf16.msra.mxu0 %v618
        %650 = vmatprep.subr.bf16.mxu0 0
        %651 = vmatpush2.bf16.msra.mxu0 0
        %652 = vmatprep.subr.bf16.mxu0 0
        %653 = vmatpush2.bf16.msra.mxu0 0
        %654 = vmatprep.subr.bf16.mxu0 0
        %655 = vmatpush2.bf16.msra.mxu0 0
        %656 = vmatprep.subr.bf16.mxu0 0
        %657 = vmatpush2.bf16.msra.mxu0 0
        %658 = vmatprep.subr.bf16.mxu0 0
        %659 = vmatpush2.bf16.msra.mxu0 0
        %660 = vmatprep.subr.bf16.mxu0 0
        %661 = vmatpush2.bf16.msra.mxu0 0
        %662 = vmatprep.subr.bf16.mxu0 0
        %663 = vmatpush2.bf16.msra.mxu0 0
        %664 = vmatprep.subr.bf16.mxu0 0
        %665 = vmatpush2.bf16.msra.mxu0 0
        %666 = vmatprep.mubr.bf16.mxu0 0
        %667 = vmatmul.mubr.bf16.gmra.mxu0 %v584
        %v668 = vpop.f32.mrf.mxu0
        %v669 = vadd.f32 0.0, %v668
        %v670 = vpop.f32.mrf.mxu0
        %v671 = vpop.f32.mrf.mxu0
        %v672 = vpop.f32.mrf.mxu0
        %673 = vdwg.mxu0
        %v674 = vpack.i.b16 %v480, %v480
        %v675 = vlaneseq
        %v676 = vshrl.u32 %v675, 7
        %v677 = vsub.s32 0, %v676
        %v678 = vrot.slane %v674, %v677
        %v696 = vunpack.c.l.b16 %v356
        %v697 = vunpack.c.l.b16 %v357
        %v698 = vunpack.c.l.b16 %v358
        %v699 = vunpack.c.l.b16 %v359
        %v700 = vunpack.c.l.b16 %v360
        %v701 = vunpack.c.l.b16 %v361
        %v702 = vunpack.c.l.b16 %v362
        %v703 = vunpack.c.l.b16 %v363
        %v704 = vunpack.c.l.b16 %v364
        %v705 = vunpack.c.l.b16 %v365
        %v706 = vunpack.c.l.b16 %v366
        %v707 = vunpack.c.l.b16 %v367
        %v708 = vunpack.c.l.b16 %v368
        %v709 = vunpack.c.l.b16 %v369
        %v710 = vunpack.c.l.b16 %v370
        %v711 = vunpack.c.l.b16 %v371
        %v712 = vpack.c.b16 %v697, %v696
        %v713 = vpack.c.b16 %v699, %v698
        %v714 = vpack.c.b16 %v701, %v700
        %v715 = vpack.c.b16 %v703, %v702
        %v716 = vpack.c.b16 %v705, %v704
        %v717 = vpack.c.b16 %v707, %v706
        %v718 = vpack.c.b16 %v709, %v708
        %v719 = vpack.c.b16 %v711, %v710
        %728 = vmatprep.subr.bf16.mxu0 0
        %729 = vmatpush1.bf16.msra.mxu0 %v719
        %730 = vmatprep.subr.bf16.mxu0 0
        %731 = vmatpush1.bf16.msra.mxu0 %v718
        %732 = vmatprep.subr.bf16.mxu0 0
        %733 = vmatpush1.bf16.msra.mxu0 %v717
        %734 = vmatprep.subr.bf16.mxu0 0
        %735 = vmatpush1.bf16.msra.mxu0 %v716
        %736 = vmatprep.subr.bf16.mxu0 0
        %737 = vmatpush1.bf16.msra.mxu0 %v715
        %738 = vmatprep.subr.bf16.mxu0 0
        %739 = vmatpush1.bf16.msra.mxu0 %v714
        %740 = vmatprep.subr.bf16.mxu0 0
        %741 = vmatpush1.bf16.msra.mxu0 %v713
        %742 = vmatprep.subr.bf16.mxu0 0
        %743 = vmatpush1.bf16.msra.mxu0 %v712
        %744 = vmatprep.subr.bf16.mxu0 0
        %745 = vmatpush2.bf16.msra.mxu0 0
        %746 = vmatprep.subr.bf16.mxu0 0
        %747 = vmatpush2.bf16.msra.mxu0 0
        %748 = vmatprep.subr.bf16.mxu0 0
        %749 = vmatpush2.bf16.msra.mxu0 0
        %750 = vmatprep.subr.bf16.mxu0 0
        %751 = vmatpush2.bf16.msra.mxu0 0
        %752 = vmatprep.subr.bf16.mxu0 0
        %753 = vmatpush2.bf16.msra.mxu0 0
        %754 = vmatprep.subr.bf16.mxu0 0
        %755 = vmatpush2.bf16.msra.mxu0 0
        %756 = vmatprep.subr.bf16.mxu0 0
        %757 = vmatpush2.bf16.msra.mxu0 0
        %758 = vmatprep.subr.bf16.mxu0 0
        %759 = vmatpush2.bf16.msra.mxu0 0
        %760 = vmatprep.mubr.bf16.mxu0 0
        %761 = vmatmul.mubr.bf16.gmra.mxu0 %v678
        %v762 = vpop.f32.mrf.mxu0
        %v763 = vadd.f32 0.0, %v762
        %v764 = vpop.f32.mrf.mxu0
        %v765 = vpop.f32.mrf.mxu0
        %v766 = vpop.f32.mrf.mxu0
        %767 = vdwg.mxu0
        %v768 = vpack.i.b16 %v481, %v481
        %v769 = vlaneseq
        %v770 = vshrl.u32 %v769, 7
        %v771 = vsub.s32 0, %v770
        %v772 = vrot.slane %v768, %v771
        %v790 = vunpack.c.l.b16 %v372
        %v791 = vunpack.c.l.b16 %v373
        %v792 = vunpack.c.l.b16 %v374
        %v793 = vunpack.c.l.b16 %v375
        %v794 = vunpack.c.l.b16 %v376
        %v795 = vunpack.c.l.b16 %v377
        %v796 = vunpack.c.l.b16 %v378
        %v797 = vunpack.c.l.b16 %v379
        %v798 = vunpack.c.l.b16 %v380
        %v799 = vunpack.c.l.b16 %v381
        %v800 = vunpack.c.l.b16 %v382
        %v801 = vunpack.c.l.b16 %v383
        %v802 = vunpack.c.l.b16 %v384
        %v803 = vunpack.c.l.b16 %v385
        %v804 = vunpack.c.l.b16 %v386
        %v805 = vunpack.c.l.b16 %v387
        %v806 = vpack.c.b16 %v791, %v790
        %v807 = vpack.c.b16 %v793, %v792
        %v808 = vpack.c.b16 %v795, %v794
        %v809 = vpack.c.b16 %v797, %v796
        %v810 = vpack.c.b16 %v799, %v798
        %v811 = vpack.c.b16 %v801, %v800
        %v812 = vpack.c.b16 %v803, %v802
        %v813 = vpack.c.b16 %v805, %v804
        %822 = vmatprep.subr.bf16.mxu0 0
        %823 = vmatpush1.bf16.msra.mxu0 %v813
        %824 = vmatprep.subr.bf16.mxu0 0
        %825 = vmatpush1.bf16.msra.mxu0 %v812
        %826 = vmatprep.subr.bf16.mxu0 0
        %827 = vmatpush1.bf16.msra.mxu0 %v811
        %828 = vmatprep.subr.bf16.mxu0 0
        %829 = vmatpush1.bf16.msra.mxu0 %v810
        %830 = vmatprep.subr.bf16.mxu0 0
        %831 = vmatpush1.bf16.msra.mxu0 %v809
        %832 = vmatprep.subr.bf16.mxu0 0
        %833 = vmatpush1.bf16.msra.mxu0 %v808
        %834 = vmatprep.subr.bf16.mxu0 0
        %835 = vmatpush1.bf16.msra.mxu0 %v807
        %836 = vmatprep.subr.bf16.mxu0 0
        %837 = vmatpush1.bf16.msra.mxu0 %v806
        %838 = vmatprep.subr.bf16.mxu0 0
        %839 = vmatpush2.bf16.msra.mxu0 0
        %840 = vmatprep.subr.bf16.mxu0 0
        %841 = vmatpush2.bf16.msra.mxu0 0
        %842 = vmatprep.subr.bf16.mxu0 0
        %843 = vmatpush2.bf16.msra.mxu0 0
        %844 = vmatprep.subr.bf16.mxu0 0
        %845 = vmatpush2.bf16.msra.mxu0 0
        %846 = vmatprep.subr.bf16.mxu0 0
        %847 = vmatpush2.bf16.msra.mxu0 0
        %848 = vmatprep.subr.bf16.mxu0 0
        %849 = vmatpush2.bf16.msra.mxu0 0
        %850 = vmatprep.subr.bf16.mxu0 0
        %851 = vmatpush2.bf16.msra.mxu0 0
        %852 = vmatprep.subr.bf16.mxu0 0
        %853 = vmatpush2.bf16.msra.mxu0 0
        %854 = vmatprep.mubr.bf16.mxu0 0
        %855 = vmatmul.mubr.bf16.gmra.mxu0 %v772
        %v856 = vpop.f32.mrf.mxu0
        %v857 = vadd.f32 0.0, %v856
        %v858 = vpop.f32.mrf.mxu0
        %v859 = vpop.f32.mrf.mxu0
        %v860 = vpop.f32.mrf.mxu0
        %861 = vdwg.mxu0
        %v862 = vpack.i.b16 %v482, %v482
        %v863 = vlaneseq
        %v864 = vshrl.u32 %v863, 7
        %v865 = vsub.s32 0, %v864
        %v866 = vrot.slane %v862, %v865
        %v884 = vunpack.c.l.b16 %v388
        %v885 = vunpack.c.l.b16 %v389
        %v886 = vunpack.c.l.b16 %v390
        %v887 = vunpack.c.l.b16 %v391
        %v888 = vunpack.c.l.b16 %v392
        %v889 = vunpack.c.l.b16 %v393
        %v890 = vunpack.c.l.b16 %v394
        %v891 = vunpack.c.l.b16 %v395
        %v892 = vunpack.c.l.b16 %v396
        %v893 = vunpack.c.l.b16 %v397
        %v894 = vunpack.c.l.b16 %v398
        %v895 = vunpack.c.l.b16 %v399
        %v896 = vunpack.c.l.b16 %v400
        %v897 = vunpack.c.l.b16 %v401
        %v898 = vunpack.c.l.b16 %v402
        %v899 = vunpack.c.l.b16 %v403
        %v900 = vpack.c.b16 %v885, %v884
        %v901 = vpack.c.b16 %v887, %v886
        %v902 = vpack.c.b16 %v889, %v888
        %v903 = vpack.c.b16 %v891, %v890
        %v904 = vpack.c.b16 %v893, %v892
        %v905 = vpack.c.b16 %v895, %v894
        %v906 = vpack.c.b16 %v897, %v896
        %v907 = vpack.c.b16 %v899, %v898
        %916 = vmatprep.subr.bf16.mxu0 0
        %917 = vmatpush1.bf16.msra.mxu0 %v907
        %918 = vmatprep.subr.bf16.mxu0 0
        %919 = vmatpush1.bf16.msra.mxu0 %v906
        %920 = vmatprep.subr.bf16.mxu0 0
        %921 = vmatpush1.bf16.msra.mxu0 %v905
        %922 = vmatprep.subr.bf16.mxu0 0
        %923 = vmatpush1.bf16.msra.mxu0 %v904
        %924 = vmatprep.subr.bf16.mxu0 0
        %925 = vmatpush1.bf16.msra.mxu0 %v903
        %926 = vmatprep.subr.bf16.mxu0 0
        %927 = vmatpush1.bf16.msra.mxu0 %v902
        %928 = vmatprep.subr.bf16.mxu0 0
        %929 = vmatpush1.bf16.msra.mxu0 %v901
        %930 = vmatprep.subr.bf16.mxu0 0
        %931 = vmatpush1.bf16.msra.mxu0 %v900
        %932 = vmatprep.subr.bf16.mxu0 0
        %933 = vmatpush2.bf16.msra.mxu0 0
        %934 = vmatprep.subr.bf16.mxu0 0
        %935 = vmatpush2.bf16.msra.mxu0 0
        %936 = vmatprep.subr.bf16.mxu0 0
        %937 = vmatpush2.bf16.msra.mxu0 0
        %938 = vmatprep.subr.bf16.mxu0 0
        %939 = vmatpush2.bf16.msra.mxu0 0
        %940 = vmatprep.subr.bf16.mxu0 0
        %941 = vmatpush2.bf16.msra.mxu0 0
        %942 = vmatprep.subr.bf16.mxu0 0
        %943 = vmatpush2.bf16.msra.mxu0 0
        %944 = vmatprep.subr.bf16.mxu0 0
        %945 = vmatpush2.bf16.msra.mxu0 0
        %946 = vmatprep.subr.bf16.mxu0 0
        %947 = vmatpush2.bf16.msra.mxu0 0
        %948 = vmatprep.mubr.bf16.mxu0 0
        %949 = vmatmul.mubr.bf16.gmra.mxu0 %v866
        %v950 = vpop.f32.mrf.mxu0
        %v951 = vadd.f32 0.0, %v950
        %v952 = vpop.f32.mrf.mxu0
        %v953 = vpop.f32.mrf.mxu0
        %v954 = vpop.f32.mrf.mxu0
        %955 = vdwg.mxu0
        %v956 = vpack.i.b16 %v483, %v483
        %v957 = vlaneseq
        %v958 = vshrl.u32 %v957, 7
        %v959 = vsub.s32 0, %v958
        %v960 = vrot.slane %v956, %v959
        %v978 = vunpack.c.l.b16 %v404
        %v979 = vunpack.c.l.b16 %v405
        %v980 = vunpack.c.l.b16 %v406
        %v981 = vunpack.c.l.b16 %v407
        %v982 = vunpack.c.l.b16 %v408
        %v983 = vunpack.c.l.b16 %v409
        %v984 = vunpack.c.l.b16 %v410
        %v985 = vunpack.c.l.b16 %v411
        %v986 = vunpack.c.l.b16 %v412
        %v987 = vunpack.c.l.b16 %v413
        %v988 = vunpack.c.l.b16 %v414
        %v989 = vunpack.c.l.b16 %v415
        %v990 = vunpack.c.l.b16 %v416
        %v991 = vunpack.c.l.b16 %v417
        %v992 = vunpack.c.l.b16 %v418
        %v993 = vunpack.c.l.b16 %v419
        %v994 = vpack.c.b16 %v979, %v978
        %v995 = vpack.c.b16 %v981, %v980
        %v996 = vpack.c.b16 %v983, %v982
        %v997 = vpack.c.b16 %v985, %v984
        %v998 = vpack.c.b16 %v987, %v986
        %v999 = vpack.c.b16 %v989, %v988
        %v1000 = vpack.c.b16 %v991, %v990
        %v1001 = vpack.c.b16 %v993, %v992
        %1010 = vmatprep.subr.bf16.mxu0 0
        %1011 = vmatpush1.bf16.msra.mxu0 %v1001
        %1012 = vmatprep.subr.bf16.mxu0 0
        %1013 = vmatpush1.bf16.msra.mxu0 %v1000
        %1014 = vmatprep.subr.bf16.mxu0 0
        %1015 = vmatpush1.bf16.msra.mxu0 %v999
        %1016 = vmatprep.subr.bf16.mxu0 0
        %1017 = vmatpush1.bf16.msra.mxu0 %v998
        %1018 = vmatprep.subr.bf16.mxu0 0
        %1019 = vmatpush1.bf16.msra.mxu0 %v997
        %1020 = vmatprep.subr.bf16.mxu0 0
        %1021 = vmatpush1.bf16.msra.mxu0 %v996
        %1022 = vmatprep.subr.bf16.mxu0 0
        %1023 = vmatpush1.bf16.msra.mxu0 %v995
        %1024 = vmatprep.subr.bf16.mxu0 0
        %1025 = vmatpush1.bf16.msra.mxu0 %v994
        %1026 = vmatprep.subr.bf16.mxu0 0
        %1027 = vmatpush2.bf16.msra.mxu0 0
        %1028 = vmatprep.subr.bf16.mxu0 0
        %1029 = vmatpush2.bf16.msra.mxu0 0
        %1030 = vmatprep.subr.bf16.mxu0 0
        %1031 = vmatpush2.bf16.msra.mxu0 0
        %1032 = vmatprep.subr.bf16.mxu0 0
        %1033 = vmatpush2.bf16.msra.mxu0 0
        %1034 = vmatprep.subr.bf16.mxu0 0
        %1035 = vmatpush2.bf16.msra.mxu0 0
        %1036 = vmatprep.subr.bf16.mxu0 0
        %1037 = vmatpush2.bf16.msra.mxu0 0
        %1038 = vmatprep.subr.bf16.mxu0 0
        %1039 = vmatpush2.bf16.msra.mxu0 0
        %1040 = vmatprep.subr.bf16.mxu0 0
        %1041 = vmatpush2.bf16.msra.mxu0 0
        %1042 = vmatprep.mubr.bf16.mxu0 0
        %1043 = vmatmul.mubr.bf16.gmra.mxu0 %v960
        %v1044 = vpop.f32.mrf.mxu0
        %v1045 = vadd.f32 0.0, %v1044
        %v1046 = vpop.f32.mrf.mxu0
        %v1047 = vpop.f32.mrf.mxu0
        %v1048 = vpop.f32.mrf.mxu0
        %1049 = vdwg.mxu0
        %v1050 = vpack.i.b16 %v484, %v484
        %v1051 = vlaneseq
        %v1052 = vshrl.u32 %v1051, 7
        %v1053 = vsub.s32 0, %v1052
        %v1054 = vrot.slane %v1050, %v1053
        %v1072 = vunpack.c.l.b16 %v420
        %v1073 = vunpack.c.l.b16 %v421
        %v1074 = vunpack.c.l.b16 %v422
        %v1075 = vunpack.c.l.b16 %v423
        %v1076 = vunpack.c.l.b16 %v424
        %v1077 = vunpack.c.l.b16 %v425
        %v1078 = vunpack.c.l.b16 %v426
        %v1079 = vunpack.c.l.b16 %v427
        %v1080 = vunpack.c.l.b16 %v428
        %v1081 = vunpack.c.l.b16 %v429
        %v1082 = vunpack.c.l.b16 %v430
        %v1083 = vunpack.c.l.b16 %v431
        %v1084 = vunpack.c.l.b16 %v432
        %v1085 = vunpack.c.l.b16 %v433
        %v1086 = vunpack.c.l.b16 %v434
        %v1087 = vunpack.c.l.b16 %v435
        %v1088 = vpack.c.b16 %v1073, %v1072
        %v1089 = vpack.c.b16 %v1075, %v1074
        %v1090 = vpack.c.b16 %v1077, %v1076
        %v1091 = vpack.c.b16 %v1079, %v1078
        %v1092 = vpack.c.b16 %v1081, %v1080
        %v1093 = vpack.c.b16 %v1083, %v1082
        %v1094 = vpack.c.b16 %v1085, %v1084
        %v1095 = vpack.c.b16 %v1087, %v1086
        %1104 = vmatprep.subr.bf16.mxu0 0
        %1105 = vmatpush1.bf16.msra.mxu0 %v1095
        %1106 = vmatprep.subr.bf16.mxu0 0
        %1107 = vmatpush1.bf16.msra.mxu0 %v1094
        %1108 = vmatprep.subr.bf16.mxu0 0
        %1109 = vmatpush1.bf16.msra.mxu0 %v1093
        %1110 = vmatprep.subr.bf16.mxu0 0
        %1111 = vmatpush1.bf16.msra.mxu0 %v1092
        %1112 = vmatprep.subr.bf16.mxu0 0
        %1113 = vmatpush1.bf16.msra.mxu0 %v1091
        %1114 = vmatprep.subr.bf16.mxu0 0
        %1115 = vmatpush1.bf16.msra.mxu0 %v1090
        %1116 = vmatprep.subr.bf16.mxu0 0
        %1117 = vmatpush1.bf16.msra.mxu0 %v1089
        %1118 = vmatprep.subr.bf16.mxu0 0
        %1119 = vmatpush1.bf16.msra.mxu0 %v1088
        %1120 = vmatprep.subr.bf16.mxu0 0
        %1121 = vmatpush2.bf16.msra.mxu0 0
        %1122 = vmatprep.subr.bf16.mxu0 0
        %1123 = vmatpush2.bf16.msra.mxu0 0
        %1124 = vmatprep.subr.bf16.mxu0 0
        %1125 = vmatpush2.bf16.msra.mxu0 0
        %1126 = vmatprep.subr.bf16.mxu0 0
        %1127 = vmatpush2.bf16.msra.mxu0 0
        %1128 = vmatprep.subr.bf16.mxu0 0
        %1129 = vmatpush2.bf16.msra.mxu0 0
        %1130 = vmatprep.subr.bf16.mxu0 0
        %1131 = vmatpush2.bf16.msra.mxu0 0
        %1132 = vmatprep.subr.bf16.mxu0 0
        %1133 = vmatpush2.bf16.msra.mxu0 0
        %1134 = vmatprep.subr.bf16.mxu0 0
        %1135 = vmatpush2.bf16.msra.mxu0 0
        %1136 = vmatprep.mubr.bf16.mxu0 0
        %1137 = vmatmul.mubr.bf16.gmra.mxu0 %v1054
        %v1138 = vpop.f32.mrf.mxu0
        %v1139 = vadd.f32 0.0, %v1138
        %v1140 = vpop.f32.mrf.mxu0
        %v1141 = vpop.f32.mrf.mxu0
        %v1142 = vpop.f32.mrf.mxu0
        %1143 = vdwg.mxu0
        %v1144 = vpack.i.b16 %v485, %v485
        %v1145 = vlaneseq
        %v1146 = vshrl.u32 %v1145, 7
        %v1147 = vsub.s32 0, %v1146
        %v1148 = vrot.slane %v1144, %v1147
        %v1166 = vunpack.c.l.b16 %v436
        %v1167 = vunpack.c.l.b16 %v437
        %v1168 = vunpack.c.l.b16 %v438
        %v1169 = vunpack.c.l.b16 %v439
        %v1170 = vunpack.c.l.b16 %v440
        %v1171 = vunpack.c.l.b16 %v441
        %v1172 = vunpack.c.l.b16 %v442
        %v1173 = vunpack.c.l.b16 %v443
        %v1174 = vunpack.c.l.b16 %v444
        %v1175 = vunpack.c.l.b16 %v445
        %v1176 = vunpack.c.l.b16 %v446
        %v1177 = vunpack.c.l.b16 %v447
        %v1178 = vunpack.c.l.b16 %v448
        %v1179 = vunpack.c.l.b16 %v449
        %v1180 = vunpack.c.l.b16 %v450
        %v1181 = vunpack.c.l.b16 %v451
        %v1182 = vpack.c.b16 %v1167, %v1166
        %v1183 = vpack.c.b16 %v1169, %v1168
        %v1184 = vpack.c.b16 %v1171, %v1170
        %v1185 = vpack.c.b16 %v1173, %v1172
        %v1186 = vpack.c.b16 %v1175, %v1174
        %v1187 = vpack.c.b16 %v1177, %v1176
        %v1188 = vpack.c.b16 %v1179, %v1178
        %v1189 = vpack.c.b16 %v1181, %v1180
        %1198 = vmatprep.subr.bf16.mxu0 0
        %1199 = vmatpush1.bf16.msra.mxu0 %v1189
        %1200 = vmatprep.subr.bf16.mxu0 0
        %1201 = vmatpush1.bf16.msra.mxu0 %v1188
        %1202 = vmatprep.subr.bf16.mxu0 0
        %1203 = vmatpush1.bf16.msra.mxu0 %v1187
        %1204 = vmatprep.subr.bf16.mxu0 0
        %1205 = vmatpush1.bf16.msra.mxu0 %v1186
        %1206 = vmatprep.subr.bf16.mxu0 0
        %1207 = vmatpush1.bf16.msra.mxu0 %v1185
        %1208 = vmatprep.subr.bf16.mxu0 0
        %1209 = vmatpush1.bf16.msra.mxu0 %v1184
        %1210 = vmatprep.subr.bf16.mxu0 0
        %1211 = vmatpush1.bf16.msra.mxu0 %v1183
        %1212 = vmatprep.subr.bf16.mxu0 0
        %1213 = vmatpush1.bf16.msra.mxu0 %v1182
        %1214 = vmatprep.subr.bf16.mxu0 0
        %1215 = vmatpush2.bf16.msra.mxu0 0
        %1216 = vmatprep.subr.bf16.mxu0 0
        %1217 = vmatpush2.bf16.msra.mxu0 0
        %1218 = vmatprep.subr.bf16.mxu0 0
        %1219 = vmatpush2.bf16.msra.mxu0 0
        %1220 = vmatprep.subr.bf16.mxu0 0
        %1221 = vmatpush2.bf16.msra.mxu0 0
        %1222 = vmatprep.subr.bf16.mxu0 0
        %1223 = vmatpush2.bf16.msra.mxu0 0
        %1224 = vmatprep.subr.bf16.mxu0 0
        %1225 = vmatpush2.bf16.msra.mxu0 0
        %1226 = vmatprep.subr.bf16.mxu0 0
        %1227 = vmatpush2.bf16.msra.mxu0 0
        %1228 = vmatprep.subr.bf16.mxu0 0
        %1229 = vmatpush2.bf16.msra.mxu0 0
        %1230 = vmatprep.mubr.bf16.mxu0 0
        %1231 = vmatmul.mubr.bf16.gmra.mxu0 %v1148
        %v1232 = vpop.f32.mrf.mxu0
        %v1233 = vadd.f32 0.0, %v1232
        %v1234 = vpop.f32.mrf.mxu0
        %v1235 = vpop.f32.mrf.mxu0
        %v1236 = vpop.f32.mrf.mxu0
        %1237 = vdwg.mxu0
        %v1238 = vld [vmem:[#allocation2] sm:$0xff]
        %v1247 = vrot.slane %v669, 7
        %vm1248 = vcmask 1041409
        %v1249 = vsel %vm1248, %v1247, %v575
        %v1250 = vrot.slane %v763, 6
        %vm1251 = vcmask 1042434
        %v1252 = vsel %vm1251, %v1250, %v1249
        %v1253 = vrot.slane %v857, 5
        %vm1254 = vcmask 1043459
        %v1255 = vsel %vm1254, %v1253, %v1252
        %v1256 = vrot.slane %v951, 4
        %vm1257 = vcmask 1044484
        %v1258 = vsel %vm1257, %v1256, %v1255
        %v1259 = vrot.slane %v1045, 3
        %vm1260 = vcmask 1045509
        %v1261 = vsel %vm1260, %v1259, %v1258
        %v1262 = vrot.slane %v1139, 2
        %vm1263 = vcmask 1046534
        %v1264 = vsel %vm1263, %v1262, %v1261
        %v1265 = vrot.slane %v1233, 1
        %vm1266 = vcmask 1047559
        %v1267 = vsel %vm1266, %v1265, %v1264
        %v1269 = vadd.f32 %v1238, %v1267
        %1270 = vst [vmem:[#allocation2] sm:$0xff] %v1269
        %v1271 = vld [vmem:[#allocation3] sm:$0xff]
        %1272 = vadd.xlane.f32.xlu0 %v323
        %v1273 = vpop.xlane.xlu0 %1272
        %v1274 = vadd.f32 %v1271, %v1273
        %vm1275 = vcmask 7168
        %1276 = vst.msk [vmem:[#allocation3] sm:$0xff] %vm1275, %v1274
        %p1277 = scmp.eq.s32.totalorder %s29, 1
        // Predicated region
        $region53: #{tpu_custom_call.1} parent=35 // pred_check
          %p1278 = pneg %p1277
        $region54: #{tpu_custom_call.1} parent=35 // pred_check_branch
          %1280 = sbr.rel (%p1278) target = $region56
        $region55: #{tpu_custom_call.1} parent=35 // pred_region
          %v1281 = vld [vmem:[#allocation3] sm:$0xff]
          %v1282 = vmax.f32 %v1281, 1.0
          %v1283 = vrcp.pop %v1282
          %v1284 = vld [vmem:[#allocation2] sm:$0xff]
          %1286 = vset.pattern.permute.xlu0 0
          %1287 = vperm.xlu0 %1286, %v1283
          %v1288 = vpop.permute.xlu0 %1287
          %v1290 = vmul.f32 %v1284, %v1288
          %v1291 = vpack.c.bf16 %v1290, %v1290
          %v1292 = vld [vmem:[#allocation9] sm:$0xff]
          %v1293 = vld [vmem:[#allocation9 + $0x8] sm:$0xff]
          %v1294 = vld [vmem:[#allocation9 + $0x10] sm:$0xff]
          %v1295 = vld [vmem:[#allocation9 + $0x18] sm:$0xff]
          %v1296 = vld [vmem:[#allocation9 + $0x20] sm:$0xff]
          %v1297 = vld [vmem:[#allocation9 + $0x28] sm:$0xff]
          %v1298 = vld [vmem:[#allocation9 + $0x30] sm:$0xff]
          %v1299 = vld [vmem:[#allocation9 + $0x38] sm:$0xff]
          %v1300 = vld [vmem:[#allocation9 + $0x40] sm:$0xff]
          %v1301 = vld [vmem:[#allocation9 + $0x48] sm:$0xff]
          %v1302 = vld [vmem:[#allocation9 + $0x50] sm:$0xff]
          %v1303 = vld [vmem:[#allocation9 + $0x58] sm:$0xff]
          %v1304 = vld [vmem:[#allocation9 + $0x60] sm:$0xff]
          %v1305 = vld [vmem:[#allocation9 + $0x68] sm:$0xff]
          %v1306 = vld [vmem:[#allocation9 + $0x70] sm:$0xff]
          %v1307 = vld [vmem:[#allocation9 + $0x78] sm:$0xff]
          %v1308 = vld [vmem:[%s3] sm:$0x3]
          %v1310 = vlaneseq
          %v1311 = vshrl.u32 %v1310, 7
          %v1312 = vsub.s32 0, %v1311
          %v1313 = vrot.slane %v1308, %v1312
          %v1314 = vlaneseq
          %v1315 = vshrl.u32 %v1314, 7
          %v1316 = vsub.s32 1, %v1315
          %v1317 = vrot.slane %v1308, %v1316
          %v1336 = vunpack.c.l.b16 %v1292
          %v1337 = vunpack.c.h.b16 %v1292
          %v1338 = vunpack.c.l.b16 %v1293
          %v1339 = vunpack.c.h.b16 %v1293
          %v1340 = vunpack.c.l.b16 %v1294
          %v1341 = vunpack.c.h.b16 %v1294
          %v1342 = vunpack.c.l.b16 %v1295
          %v1343 = vunpack.c.h.b16 %v1295
          %v1344 = vunpack.c.l.b16 %v1296
          %v1345 = vunpack.c.h.b16 %v1296
          %v1346 = vunpack.c.l.b16 %v1297
          %v1347 = vunpack.c.h.b16 %v1297
          %v1348 = vunpack.c.l.b16 %v1298
          %v1349 = vunpack.c.h.b16 %v1298
          %v1350 = vunpack.c.l.b16 %v1299
          %v1351 = vunpack.c.h.b16 %v1299
          %v1352 = vunpack.c.l.b16 %v1300
          %v1353 = vunpack.c.h.b16 %v1300
          %v1354 = vunpack.c.l.b16 %v1301
          %v1355 = vunpack.c.h.b16 %v1301
          %v1356 = vunpack.c.l.b16 %v1302
          %v1357 = vunpack.c.h.b16 %v1302
          %v1358 = vunpack.c.l.b16 %v1303
          %v1359 = vunpack.c.h.b16 %v1303
          %v1360 = vunpack.c.l.b16 %v1304
          %v1361 = vunpack.c.h.b16 %v1304
          %v1362 = vunpack.c.l.b16 %v1305
          %v1363 = vunpack.c.h.b16 %v1305
          %v1364 = vunpack.c.l.b16 %v1306
          %v1365 = vunpack.c.h.b16 %v1306
          %v1366 = vunpack.c.l.b16 %v1307
          %v1367 = vunpack.c.h.b16 %v1307
          %v1368 = vpack.c.b16 %v1338, %v1336
          %v1369 = vpack.c.b16 %v1339, %v1337
          %v1370 = vpack.c.b16 %v1342, %v1340
          %v1371 = vpack.c.b16 %v1343, %v1341
          %v1372 = vpack.c.b16 %v1346, %v1344
          %v1373 = vpack.c.b16 %v1347, %v1345
          %v1374 = vpack.c.b16 %v1350, %v1348
          %v1375 = vpack.c.b16 %v1351, %v1349
          %v1376 = vpack.c.b16 %v1354, %v1352
          %v1377 = vpack.c.b16 %v1355, %v1353
          %v1378 = vpack.c.b16 %v1358, %v1356
          %v1379 = vpack.c.b16 %v1359, %v1357
          %v1380 = vpack.c.b16 %v1362, %v1360
          %v1381 = vpack.c.b16 %v1363, %v1361
          %v1382 = vpack.c.b16 %v1366, %v1364
          %v1383 = vpack.c.b16 %v1367, %v1365
          %1400 = vmatprep.subr.bf16.mxu0 %v1383
          %1401 = vmatpush1.bf16.msra.mxu0 %v1382
          %1402 = vmatprep.subr.bf16.mxu0 %v1381
          %1403 = vmatpush1.bf16.msra.mxu0 %v1380
          %1404 = vmatprep.subr.bf16.mxu0 %v1379
          %1405 = vmatpush1.bf16.msra.mxu0 %v1378
          %1406 = vmatprep.subr.bf16.mxu0 %v1377
          %1407 = vmatpush1.bf16.msra.mxu0 %v1376
          %1408 = vmatprep.subr.bf16.mxu0 %v1375
          %1409 = vmatpush1.bf16.msra.mxu0 %v1374
          %1410 = vmatprep.subr.bf16.mxu0 %v1373
          %1411 = vmatpush1.bf16.msra.mxu0 %v1372
          %1412 = vmatprep.subr.bf16.mxu0 %v1371
          %1413 = vmatpush1.bf16.msra.mxu0 %v1370
          %1414 = vmatprep.subr.bf16.mxu0 %v1369
          %1415 = vmatpush1.bf16.msra.mxu0 %v1368
          %1416 = vmatprep.subr.bf16.mxu0 0
          %1417 = vmatpush2.bf16.msra.mxu0 0
          %1418 = vmatprep.subr.bf16.mxu0 0
          %1419 = vmatpush2.bf16.msra.mxu0 0
          %1420 = vmatprep.subr.bf16.mxu0 0
          %1421 = vmatpush2.bf16.msra.mxu0 0
          %1422 = vmatprep.subr.bf16.mxu0 0
          %1423 = vmatpush2.bf16.msra.mxu0 0
          %1424 = vmatprep.subr.bf16.mxu0 0
          %1425 = vmatpush2.bf16.msra.mxu0 0
          %1426 = vmatprep.subr.bf16.mxu0 0
          %1427 = vmatpush2.bf16.msra.mxu0 0
          %1428 = vmatprep.subr.bf16.mxu0 0
          %1429 = vmatpush2.bf16.msra.mxu0 0
          %1430 = vmatprep.subr.bf16.mxu0 0
          %1431 = vmatpush2.bf16.msra.mxu0 0
          %1432 = vmatprep.mubr.bf16.mxu0 0
          %1433 = vmatmul.mubr.bf16.gmra.mxu0 %v1291
          %v1434 = vpop.f32.mrf.mxu0
          %v1435 = vadd.f32 %v1313, %v1434
          %v1436 = vpop.f32.mrf.mxu0
          %v1437 = vadd.f32 %v1317, %v1436
          %v1438 = vpop.f32.mrf.mxu0
          %v1439 = vpop.f32.mrf.mxu0
          %1440 = vdwg.mxu0
          %1441 = vst [vmem:[%s312] sm:$0xff] %v1435
          %1442 = vst [vmem:[%s312 + $0x8] sm:$0xff] %v1437
        $region56: #{tpu_custom_call.1} parent=35 // pred_fallthru
          _
        %s1443 = sand.u32 %s142, 1
        %s1444 = scalar_lea.sflag [#allocation6], %s1443
        %s1445 = sand.u32 %s142, 1
        %s1446 = smul.addr %s1445, 16
        %s1447 = scalar_lea.vmem [#allocation10], %s1446
        // Predicated region
        $region57: #{tpu_custom_call.1} parent=35 // pred_check
          %p1448 = pneg %p152
        $region58: #{tpu_custom_call.1} parent=35 // pred_check_branch
          %1450 = sbr.rel (%p1448) target = $region60
        $region59: #{tpu_custom_call.1} parent=35 // pred_region
          %s1452 = ssub.s32 256, 256
          %1453 = vsyncadd %s1444, %s1452
          %s1454 = smul.addr %s28, 2
          %s1455 = smul.addr %s1454, 128
          %s1456 = scalar_lea.hbm %s4, %s1455
          %s1458 = sshll.u32 %s1447, 4
          %s1459 = int_to_ptr.vmem [resolvable:$true] %s1458
          %1461 = dma.vmem_to_hbm [thread:$0]  %s1459, 256, %s1456, %s1444
        $region60: #{tpu_custom_call.1} parent=35 // pred_fallthru
          _
      $region36: #{tpu_custom_call.1} parent=5 // pred_fallthru
        _
      %p1462 = scmp.le.s32.totalorder 2, %s19
      // Predicated region
      $region61: #{tpu_custom_call.1} parent=5 // pred_check
        %p1463 = pneg %p1462
      $region62: #{tpu_custom_call.1} parent=5 // pred_check_branch
        %1465 = sbr.rel (%p1463) target = $region64
      $region63: #{tpu_custom_call.1} parent=5 // pred_region
        %s1466 = ssub.s32 %s19, 2
        // Predicated region
        $region65: #{tpu_custom_call.1} parent=63 // pred_check
          %p1467 = pneg %p158
        $region66: #{tpu_custom_call.1} parent=63 // pred_check_branch
          %1469 = sbr.rel (%p1467) target = $region68
        $region67: #{tpu_custom_call.1} parent=63 // pred_region
          %s1470 = sand.u32 %s143, 1
          %s1471 = scalar_lea.sflag [#allocation6], %s1470
          %s1472 = sand.u32 %s143, 1
          %s1473 = smul.addr %s1472, 16
          %s1474 = scalar_lea.vmem [#allocation10], %s1473
          %1475 = dma.done %s1471, 256
        $region68: #{tpu_custom_call.1} parent=63 // pred_fallthru
          _
      $region64: #{tpu_custom_call.1} parent=5 // pred_fallthru
        _
    $region6: #{tpu_custom_call.1} parent=1 // loop_footer
      %s23 = sadd.s32 1, %s19
    $region7: #{tpu_custom_call.1} parent=1 // loop_footer_branch
      %18 = sbr.rel target = $region3
    $region8: #{tpu_custom_call.1} parent=1 // loop_exit
      _
    %1476 = vsyncpa [#allocation5], 1
    %s1477 = scalar_lea.sflag [#allocation5], 1
    %1478 = vsyncpa %s1477, 1
    %1479 = vsyncpa [#allocation8], 1
    %s1480 = scalar_lea.sflag [#allocation8], 1
    %1481 = vsyncpa %s1480, 1
    %1482 = vsyncpa [#allocation6], 1
    %s1483 = scalar_lea.sflag [#allocation6], 1
    %1484 = vsyncpa %s1483, 1

</llo_original>
